<compile_context>
chip_gen: v6e
topology: v6e:2x2x1
jax: 0.10.0
libtpu: 0.0.40
codegen_flags: <defaults>
</compile_context>

<pallas_src>
import jax
import jax.numpy as jnp
from jax.experimental import pallas as pl
from jax.experimental.pallas import tpu as pltpu


def _flip_kernel(x_ref, o_ref):
    # elementwise negation: y = -x
    o_ref[...] = -x_ref[...]


# Minimum sublane count per element width (f32 -> 8, bf16 -> 16, int8/fp8 -> 32).
_MIN_SUBLANES = {4: 8, 2: 16, 1: 32}

# Below this, XLA's fused negate is already at roofline; a kernel launch only adds overhead.
_MIN_PALLAS_BYTES = 256 * 1024


def _round_up(a: int, b: int) -> int:
    return ((a + b - 1) // b) * b


def _tpu_generation():
    """Return (num_tensorcores, target_block_bytes) keyed on the TPU generation."""
    kind = ""
    try:
        kind = (getattr(jax.devices()[0], "device_kind", "") or "").lower()
    except Exception:
        pass
    if "v7" in kind:
        # 2 TensorCores per chip, but only 64 MiB physical VMEM (32 MiB scoped
        # default) -> keep blocks modest and leave headroom for double-buffering.
        return 2, 2 * 1024 * 1024
    if "v5" in kind or "v6" in kind:
        # Single TensorCore, 128 MiB physical VMEM -> slightly larger blocks
        # (fewer ~0.35us per-step overheads, ~86% of HBM roofline).
        return 1, 4 * 1024 * 1024
    # Unknown device: conservative defaults.
    return 1, 2 * 1024 * 1024


def flip(x: jax.Array) -> jax.Array:
    """Pallas TPU implementation of Flip.forward: return -x (any shape)."""
    orig_shape = x.shape
    dtype = x.dtype
    n = x.size
    if n == 0:
        return x

    itemsize = jnp.dtype(dtype).itemsize
    min_sub = _MIN_SUBLANES.get(itemsize)

    # Tiny inputs, or element widths we don't tile (e.g. 8-byte dtypes): the
    # fused XLA negate is already at the HBM roofline -> no kernel launch.
    if min_sub is None or n * itemsize < _MIN_PALLAS_BYTES:
        return -x

    # Fast path: widest lane-dense last dim that divides n exactly, so the
    # reshapes below are free (bitcasts).  Only `n % lanes == 0` is required.
    lanes = None
    for cand in (4096, 2048, 1024, 512, 256, 128):
        if n % cand == 0:
            lanes = cand
            break
    if lanes is None:
        # Ragged size (n not a multiple of 128).  A pad+kernel+slice path would
        # stream the tensor through HBM ~3x; XLA's fused negate does one read +
        # one write, which is optimal for this memory-bound op.
        # TODO(synk): in-kernel masked-tail path if a Pallas-only ragged path is ever required.
        return -x

    rows = n // lanes
    x2d = x.reshape(rows, lanes)

    num_cores, target_block_bytes = _tpu_generation()

    # Multi-MiB row tile, rounded down to the dtype's sublane granularity.
    tile_rows = (target_block_bytes // (lanes * itemsize)) // min_sub * min_sub
    tile_rows = max(min_sub, tile_rows)
    # A full-dim block (tile_rows == rows) is always legal, even if rows is not
    # a multiple of min_sub.
    tile_rows = min(tile_rows, rows)

    # v7x only: shard the grid across both TensorCores with an EVEN number of
    # steps (and >= 8 steps when each step still moves >= ~256 KiB) so both
    # cores get balanced, pipelined work.  Single-TC chips (v5e/v6e) keep the
    # single big block — splitting there is pure per-step overhead.
    if num_cores >= 2 and rows >= 2 * min_sub:
        steps = pl.cdiv(rows, tile_rows)
        desired = steps
        if desired < 8 and rows >= 8 * min_sub and n * itemsize >= 8 * (256 * 1024):
            desired = 8
        if desired % 2:
            desired += 1
        if desired != steps:
            tile_rows = _round_up(pl.cdiv(rows, desired), min_sub)
            tile_rows = max(min_sub, min(tile_rows, rows))

    grid = (pl.cdiv(rows, tile_rows),)  # Pallas masks the partial last row-block.

    y2d = pl.pallas_call(
        _flip_kernel,
        out_shape=jax.ShapeDtypeStruct((rows, lanes), dtype),
        grid_spec=pl.GridSpec(
            grid=grid,
            in_specs=[pl.BlockSpec((tile_rows, lanes), lambda i: (i, 0))],
            out_specs=pl.BlockSpec((tile_rows, lanes), lambda i: (i, 0)),
        ),
        compiler_params=pltpu.CompilerParams(
            dimension_semantics=("parallel",),
            vmem_limit_bytes=32 * 1024 * 1024,
        ),
    )(x2d)

    return y2d.reshape(orig_shape)


if __name__ == "__main__":
    key = jax.random.PRNGKey(0)
    k0, k1, k2, k3, k4 = jax.random.split(key, 5)

    # 1) Small NCHW input consistent with conv-style usage in pretrained_networks.py
    #    (goes through the tiny-input short-circuit — fused negate).
    x = jax.random.normal(k0, (2, 4, 16, 16), dtype=jnp.float32)
    y = flip(x)
    jax.block_until_ready(y)
    assert y.shape == x.shape and y.dtype == x.dtype
    assert jnp.allclose(y, -x), "mismatch vs reference -x (tiny path)"

    # 2) Larger f32 feature map: exercises the Pallas fast path (lane-dense slab).
    x_big = jax.random.normal(k1, (2, 64, 32, 32), dtype=jnp.float32)
    y_big = flip(x_big)
    jax.block_until_ready(y_big)
    assert y_big.shape == x_big.shape and y_big.dtype == x_big.dtype
    assert jnp.allclose(y_big, -x_big), "mismatch vs reference -x (fast path, f32)"

    # 3) bf16 feature map: exercises min_sub=16 tiling on the Pallas path.
    x_bf = jax.random.normal(k2, (2, 96, 32, 32), dtype=jnp.bfloat16)
    y_bf = flip(x_bf)
    jax.block_until_ready(y_bf)
    assert y_bf.shape == x_bf.shape and y_bf.dtype == x_bf.dtype
    assert jnp.allclose(y_bf.astype(jnp.float32), -x_bf.astype(jnp.float32)), \
        "mismatch vs reference -x (fast path, bf16)"

    # 4) Row count not a multiple of the sublane granularity: exercises the
    #    relaxed divisibility + masked partial last block on the Pallas path.
    x_odd_rows = jax.random.normal(k3, (17, 64, 64), dtype=jnp.float32)  # 17*4096 elems
    y_odd_rows = flip(x_odd_rows)
    jax.block_until_ready(y_odd_rows)
    assert y_odd_rows.shape == x_odd_rows.shape and y_odd_rows.dtype == x_odd_rows.dtype
    assert jnp.allclose(y_odd_rows, -x_odd_rows), "mismatch vs reference -x (partial block)"

    # 5) Ragged size (n % 128 != 0): single-pass fused-negate fallback.
    x_ragged = jax.random.normal(k4, (3, 5, 7), dtype=jnp.float32)
    y_ragged = flip(x_ragged)
    jax.block_until_ready(y_ragged)
    assert y_ragged.shape == x_ragged.shape and y_ragged.dtype == x_ragged.dtype
    assert jnp.allclose(y_ragged, -x_ragged), "mismatch vs reference -x (ragged path)"

    print("KERNEL_OK")
</pallas_src>

<mosaic_0001>
module attributes {stable_mosaic.version = 11 : i64} {
  func.func @_flip_kernel(%arg0: i32, %arg1: memref<32x4096xf32, #tpu.memory_space<vmem>>, %arg2: memref<32x4096xf32, #tpu.memory_space<vmem>>) attributes {dimension_semantics = [#tpu.dimension_semantics<parallel>], iteration_bounds = array<i64: 1>, scalar_prefetch = 0 : i64, scratch_operands = 0 : i64, tpu.core_type = #tpu.core_type<tc>, window_params = [{transform_indices = @transform_0, window_bounds = array<i64: 32, 4096>}, {transform_indices = @transform_1, window_bounds = array<i64: 32, 4096>}]} {
    %c0 = arith.constant 0 : index
    %c0_0 = arith.constant 0 : index
    %0 = vector.load %arg1[%c0, %c0_0] : memref<32x4096xf32, #tpu.memory_space<vmem>>, vector<32x4096xf32>
    %cst = arith.constant 0.000000e+00 : f32
    %1 = vector.broadcast %cst : f32 to vector<32x4096xf32>
    %2 = arith.subf %1, %0 : vector<32x4096xf32>
    %c0_1 = arith.constant 0 : index
    %c0_2 = arith.constant 0 : index
    %3 = vector.load %arg2[%c0_1, %c0_2] : memref<32x4096xf32, #tpu.memory_space<vmem>>, vector<32x4096xf32>
    tpu.vector_store %arg2[%c0_1, %c0_2], %2 {strides = array<i32>} : memref<32x4096xf32, #tpu.memory_space<vmem>>, vector<32x4096xf32>,
    return
  }
  func.func @transform_0(%arg0: i32) -> (i32, i32) {
    %c0_i32 = arith.constant 0 : i32
    %c0_i32_0 = arith.constant 0 : i32
    return %arg0, %c0_i32 : i32, i32
  }
  func.func @transform_1(%arg0: i32) -> (i32, i32) {
    %c0_i32 = arith.constant 0 : i32
    %c0_i32_0 = arith.constant 0 : i32
    return %arg0, %c0_i32 : i32, i32
  }
}

</mosaic_0001>

<llo_original>
// kernel: tpu_custom_call.1
$region0: #{tpu_custom_call.1}
  #allocation0 [shape = 'u32[]', space=smem, size = 0x4, offset = 0x4, fixed_abs, tag = 'smem constant byte address 0x4 - core index']
  #allocation1 [shape = 'u32[144,128]{1,0:T(1,128)}', space=vmem, size = 0x12000, scoped, tag = 'internal scratch']
  %s0 = inlined_call_operand.hbm [shape: f32[32,4096], index: 0, kind: input, shape index: {}]
  %s1 = inlined_call_operand.hbm [shape: f32[32,4096], index: 1, kind: output, shape index: {}]
  %s2 = sld [smem:[#allocation0]]
  $region18: #{tpu_custom_call.1} parent=0
    _
  %s4 = ssub.s32 1, %s2
  %s5 = scalar_select 0, %s4, %s2
  $region1: #{tpu_custom_call.1} parent=0
    #allocation2 [shape = 'u8[524288]{0}', space=vmem, size = 0x80000, scoped, tag = 'input window, operand 0, single buffered']
    #allocation3 [shape = 's32[1]{0}', space=sflag, size = 0x4, scoped, tag = 'scoped memory for tpu_custom_call.1']
    #allocation4 [shape = 's32[1]{0}', space=sflag, size = 0x4, scoped, tag = 'scoped memory for tpu_custom_call.1']
    #allocation5 [shape = 'u8[524288]{0}', space=vmem, size = 0x80000, scoped, tag = 'output window, operand 0, single buffered']
    %6 = vsyncpa [#allocation3], 0
    %7 = vsyncpa [#allocation4], 0
    // Predicated region
    $region2: #{tpu_custom_call.1} parent=1 // pred_check
      _
    $region3: #{tpu_custom_call.1} parent=1 // pred_check_branch
      %9 = sbr.rel (0) target = $region5
    $region4: #{tpu_custom_call.1} parent=1 // pred_region
      %s11 = ssub.s32 16384, 16384
      %12 = vsyncadd [#allocation3], %s11
      %s13 = sshll.u32 [#allocation2], 4
      %s14 = int_to_ptr.vmem [resolvable:$true] %s13
      %19 = dma.hbm_to_vmem [thread:$0]  %s0, 16384, %s14, [#allocation3], 4096, 4096, 256
    $region5: #{tpu_custom_call.1} parent=1 // pred_fallthru
      _
    // Predicated region
    $region6: #{tpu_custom_call.1} parent=1 // pred_check
      _
    $region7: #{tpu_custom_call.1} parent=1 // pred_check_branch
      %21 = sbr.rel (0) target = $region9
    $region8: #{tpu_custom_call.1} parent=1 // pred_region
      %22 = dma.done [#allocation3], 16384
    $region9: #{tpu_custom_call.1} parent=1 // pred_fallthru
      _
    %v23 = vld [vmem:[#allocation2] sm:$0xff]
    %v24 = vld [vmem:[#allocation2 + $0x8] sm:$0xff]
    %v25 = vld [vmem:[#allocation2 + $0x10] sm:$0xff]
    %v26 = vld [vmem:[#allocation2 + $0x18] sm:$0xff]
    %v27 = vld [vmem:[#allocation2 + $0x20] sm:$0xff]
    %v28 = vld [vmem:[#allocation2 + $0x28] sm:$0xff]
    %v29 = vld [vmem:[#allocation2 + $0x30] sm:$0xff]
    %v30 = vld [vmem:[#allocation2 + $0x38] sm:$0xff]
    %v31 = vld [vmem:[#allocation2 + $0x40] sm:$0xff]
    %v32 = vld [vmem:[#allocation2 + $0x48] sm:$0xff]
    %v33 = vld [vmem:[#allocation2 + $0x50] sm:$0xff]
    %v34 = vld [vmem:[#allocation2 + $0x58] sm:$0xff]
    %v35 = vld [vmem:[#allocation2 + $0x60] sm:$0xff]
    %v36 = vld [vmem:[#allocation2 + $0x68] sm:$0xff]
    %v37 = vld [vmem:[#allocation2 + $0x70] sm:$0xff]
    %v38 = vld [vmem:[#allocation2 + $0x78] sm:$0xff]
    %v39 = vld [vmem:[#allocation2 + $0x80] sm:$0xff]
    %v40 = vld [vmem:[#allocation2 + $0x88] sm:$0xff]
    %v41 = vld [vmem:[#allocation2 + $0x90] sm:$0xff]
    %v42 = vld [vmem:[#allocation2 + $0x98] sm:$0xff]
    %v43 = vld [vmem:[#allocation2 + $0xa0] sm:$0xff]
    %v44 = vld [vmem:[#allocation2 + $0xa8] sm:$0xff]
    %v45 = vld [vmem:[#allocation2 + $0xb0] sm:$0xff]
    %v46 = vld [vmem:[#allocation2 + $0xb8] sm:$0xff]
    %v47 = vld [vmem:[#allocation2 + $0xc0] sm:$0xff]
    %v48 = vld [vmem:[#allocation2 + $0xc8] sm:$0xff]
    %v49 = vld [vmem:[#allocation2 + $0xd0] sm:$0xff]
    %v50 = vld [vmem:[#allocation2 + $0xd8] sm:$0xff]
    %v51 = vld [vmem:[#allocation2 + $0xe0] sm:$0xff]
    %v52 = vld [vmem:[#allocation2 + $0xe8] sm:$0xff]
    %v53 = vld [vmem:[#allocation2 + $0xf0] sm:$0xff]
    %v54 = vld [vmem:[#allocation2 + $0xf8] sm:$0xff]
    %v55 = vld [vmem:[#allocation2 + $0x100] sm:$0xff]
    %v56 = vld [vmem:[#allocation2 + $0x108] sm:$0xff]
    %v57 = vld [vmem:[#allocation2 + $0x110] sm:$0xff]
    %v58 = vld [vmem:[#allocation2 + $0x118] sm:$0xff]
    %v59 = vld [vmem:[#allocation2 + $0x120] sm:$0xff]
    %v60 = vld [vmem:[#allocation2 + $0x128] sm:$0xff]
    %v61 = vld [vmem:[#allocation2 + $0x130] sm:$0xff]
    %v62 = vld [vmem:[#allocation2 + $0x138] sm:$0xff]
    %v63 = vld [vmem:[#allocation2 + $0x140] sm:$0xff]
    %v64 = vld [vmem:[#allocation2 + $0x148] sm:$0xff]
    %v65 = vld [vmem:[#allocation2 + $0x150] sm:$0xff]
    %v66 = vld [vmem:[#allocation2 + $0x158] sm:$0xff]
    %v67 = vld [vmem:[#allocation2 + $0x160] sm:$0xff]
    %v68 = vld [vmem:[#allocation2 + $0x168] sm:$0xff]
    %v69 = vld [vmem:[#allocation2 + $0x170] sm:$0xff]
    %v70 = vld [vmem:[#allocation2 + $0x178] sm:$0xff]
    %v71 = vld [vmem:[#allocation2 + $0x180] sm:$0xff]
    %v72 = vld [vmem:[#allocation2 + $0x188] sm:$0xff]
    %v73 = vld [vmem:[#allocation2 + $0x190] sm:$0xff]
    %v74 = vld [vmem:[#allocation2 + $0x198] sm:$0xff]
    %v75 = vld [vmem:[#allocation2 + $0x1a0] sm:$0xff]
    %v76 = vld [vmem:[#allocation2 + $0x1a8] sm:$0xff]
    %v77 = vld [vmem:[#allocation2 + $0x1b0] sm:$0xff]
    %v78 = vld [vmem:[#allocation2 + $0x1b8] sm:$0xff]
    %v79 = vld [vmem:[#allocation2 + $0x1c0] sm:$0xff]
    %v80 = vld [vmem:[#allocation2 + $0x1c8] sm:$0xff]
    %v81 = vld [vmem:[#allocation2 + $0x1d0] sm:$0xff]
    %v82 = vld [vmem:[#allocation2 + $0x1d8] sm:$0xff]
    %v83 = vld [vmem:[#allocation2 + $0x1e0] sm:$0xff]
    %v84 = vld [vmem:[#allocation2 + $0x1e8] sm:$0xff]
    %v85 = vld [vmem:[#allocation2 + $0x1f0] sm:$0xff]
    %v86 = vld [vmem:[#allocation2 + $0x1f8] sm:$0xff]
    %v87 = vld [vmem:[#allocation2 + $0x200] sm:$0xff]
    %v88 = vld [vmem:[#allocation2 + $0x208] sm:$0xff]
    %v89 = vld [vmem:[#allocation2 + $0x210] sm:$0xff]
    %v90 = vld [vmem:[#allocation2 + $0x218] sm:$0xff]
    %v91 = vld [vmem:[#allocation2 + $0x220] sm:$0xff]
    %v92 = vld [vmem:[#allocation2 + $0x228] sm:$0xff]
    %v93 = vld [vmem:[#allocation2 + $0x230] sm:$0xff]
    %v94 = vld [vmem:[#allocation2 + $0x238] sm:$0xff]
    %v95 = vld [vmem:[#allocation2 + $0x240] sm:$0xff]
    %v96 = vld [vmem:[#allocation2 + $0x248] sm:$0xff]
    %v97 = vld [vmem:[#allocation2 + $0x250] sm:$0xff]
    %v98 = vld [vmem:[#allocation2 + $0x258] sm:$0xff]
    %v99 = vld [vmem:[#allocation2 + $0x260] sm:$0xff]
    %v100 = vld [vmem:[#allocation2 + $0x268] sm:$0xff]
    %v101 = vld [vmem:[#allocation2 + $0x270] sm:$0xff]
    %v102 = vld [vmem:[#allocation2 + $0x278] sm:$0xff]
    %v103 = vld [vmem:[#allocation2 + $0x280] sm:$0xff]
    %v104 = vld [vmem:[#allocation2 + $0x288] sm:$0xff]
    %v105 = vld [vmem:[#allocation2 + $0x290] sm:$0xff]
    %v106 = vld [vmem:[#allocation2 + $0x298] sm:$0xff]
    %v107 = vld [vmem:[#allocation2 + $0x2a0] sm:$0xff]
    %v108 = vld [vmem:[#allocation2 + $0x2a8] sm:$0xff]
    %v109 = vld [vmem:[#allocation2 + $0x2b0] sm:$0xff]
    %v110 = vld [vmem:[#allocation2 + $0x2b8] sm:$0xff]
    %v111 = vld [vmem:[#allocation2 + $0x2c0] sm:$0xff]
    %v112 = vld [vmem:[#allocation2 + $0x2c8] sm:$0xff]
    %v113 = vld [vmem:[#allocation2 + $0x2d0] sm:$0xff]
    %v114 = vld [vmem:[#allocation2 + $0x2d8] sm:$0xff]
    %v115 = vld [vmem:[#allocation2 + $0x2e0] sm:$0xff]
    %v116 = vld [vmem:[#allocation2 + $0x2e8] sm:$0xff]
    %v117 = vld [vmem:[#allocation2 + $0x2f0] sm:$0xff]
    %v118 = vld [vmem:[#allocation2 + $0x2f8] sm:$0xff]
    %v119 = vld [vmem:[#allocation2 + $0x300] sm:$0xff]
    %v120 = vld [vmem:[#allocation2 + $0x308] sm:$0xff]
    %v121 = vld [vmem:[#allocation2 + $0x310] sm:$0xff]
    %v122 = vld [vmem:[#allocation2 + $0x318] sm:$0xff]
    %v123 = vld [vmem:[#allocation2 + $0x320] sm:$0xff]
    %v124 = vld [vmem:[#allocation2 + $0x328] sm:$0xff]
    %v125 = vld [vmem:[#allocation2 + $0x330] sm:$0xff]
    %v126 = vld [vmem:[#allocation2 + $0x338] sm:$0xff]
    %v127 = vld [vmem:[#allocation2 + $0x340] sm:$0xff]
    %v128 = vld [vmem:[#allocation2 + $0x348] sm:$0xff]
    %v129 = vld [vmem:[#allocation2 + $0x350] sm:$0xff]
    %v130 = vld [vmem:[#allocation2 + $0x358] sm:$0xff]
    %v131 = vld [vmem:[#allocation2 + $0x360] sm:$0xff]
    %v132 = vld [vmem:[#allocation2 + $0x368] sm:$0xff]
    %v133 = vld [vmem:[#allocation2 + $0x370] sm:$0xff]
    %v134 = vld [vmem:[#allocation2 + $0x378] sm:$0xff]
    %v135 = vld [vmem:[#allocation2 + $0x380] sm:$0xff]
    %v136 = vld [vmem:[#allocation2 + $0x388] sm:$0xff]
    %v137 = vld [vmem:[#allocation2 + $0x390] sm:$0xff]
    %v138 = vld [vmem:[#allocation2 + $0x398] sm:$0xff]
    %v139 = vld [vmem:[#allocation2 + $0x3a0] sm:$0xff]
    %v140 = vld [vmem:[#allocation2 + $0x3a8] sm:$0xff]
    %v141 = vld [vmem:[#allocation2 + $0x3b0] sm:$0xff]
    %v142 = vld [vmem:[#allocation2 + $0x3b8] sm:$0xff]
    %v143 = vld [vmem:[#allocation2 + $0x3c0] sm:$0xff]
    %v144 = vld [vmem:[#allocation2 + $0x3c8] sm:$0xff]
    %v145 = vld [vmem:[#allocation2 + $0x3d0] sm:$0xff]
    %v146 = vld [vmem:[#allocation2 + $0x3d8] sm:$0xff]
    %v147 = vld [vmem:[#allocation2 + $0x3e0] sm:$0xff]
    %v148 = vld [vmem:[#allocation2 + $0x3e8] sm:$0xff]
    %v149 = vld [vmem:[#allocation2 + $0x3f0] sm:$0xff]
    %v150 = vld [vmem:[#allocation2 + $0x3f8] sm:$0xff]
    %v151 = vsub.f32 0.0, %v23
    %v152 = vsub.f32 0.0, %v24
    %v153 = vsub.f32 0.0, %v25
    %v154 = vsub.f32 0.0, %v26
    %v155 = vsub.f32 0.0, %v27
    %v156 = vsub.f32 0.0, %v28
    %v157 = vsub.f32 0.0, %v29
    %v158 = vsub.f32 0.0, %v30
    %v159 = vsub.f32 0.0, %v31
    %v160 = vsub.f32 0.0, %v32
    %v161 = vsub.f32 0.0, %v33
    %v162 = vsub.f32 0.0, %v34
    %v163 = vsub.f32 0.0, %v35
    %v164 = vsub.f32 0.0, %v36
    %v165 = vsub.f32 0.0, %v37
    %v166 = vsub.f32 0.0, %v38
    %v167 = vsub.f32 0.0, %v39
    %v168 = vsub.f32 0.0, %v40
    %v169 = vsub.f32 0.0, %v41
    %v170 = vsub.f32 0.0, %v42
    %v171 = vsub.f32 0.0, %v43
    %v172 = vsub.f32 0.0, %v44
    %v173 = vsub.f32 0.0, %v45
    %v174 = vsub.f32 0.0, %v46
    %v175 = vsub.f32 0.0, %v47
    %v176 = vsub.f32 0.0, %v48
    %v177 = vsub.f32 0.0, %v49
    %v178 = vsub.f32 0.0, %v50
    %v179 = vsub.f32 0.0, %v51
    %v180 = vsub.f32 0.0, %v52
    %v181 = vsub.f32 0.0, %v53
    %v182 = vsub.f32 0.0, %v54
    %v183 = vsub.f32 0.0, %v55
    %v184 = vsub.f32 0.0, %v56
    %v185 = vsub.f32 0.0, %v57
    %v186 = vsub.f32 0.0, %v58
    %v187 = vsub.f32 0.0, %v59
    %v188 = vsub.f32 0.0, %v60
    %v189 = vsub.f32 0.0, %v61
    %v190 = vsub.f32 0.0, %v62
    %v191 = vsub.f32 0.0, %v63
    %v192 = vsub.f32 0.0, %v64
    %v193 = vsub.f32 0.0, %v65
    %v194 = vsub.f32 0.0, %v66
    %v195 = vsub.f32 0.0, %v67
    %v196 = vsub.f32 0.0, %v68
    %v197 = vsub.f32 0.0, %v69
    %v198 = vsub.f32 0.0, %v70
    %v199 = vsub.f32 0.0, %v71
    %v200 = vsub.f32 0.0, %v72
    %v201 = vsub.f32 0.0, %v73
    %v202 = vsub.f32 0.0, %v74
    %v203 = vsub.f32 0.0, %v75
    %v204 = vsub.f32 0.0, %v76
    %v205 = vsub.f32 0.0, %v77
    %v206 = vsub.f32 0.0, %v78
    %v207 = vsub.f32 0.0, %v79
    %v208 = vsub.f32 0.0, %v80
    %v209 = vsub.f32 0.0, %v81
    %v210 = vsub.f32 0.0, %v82
    %v211 = vsub.f32 0.0, %v83
    %v212 = vsub.f32 0.0, %v84
    %v213 = vsub.f32 0.0, %v85
    %v214 = vsub.f32 0.0, %v86
    %v215 = vsub.f32 0.0, %v87
    %v216 = vsub.f32 0.0, %v88
    %v217 = vsub.f32 0.0, %v89
    %v218 = vsub.f32 0.0, %v90
    %v219 = vsub.f32 0.0, %v91
    %v220 = vsub.f32 0.0, %v92
    %v221 = vsub.f32 0.0, %v93
    %v222 = vsub.f32 0.0, %v94
    %v223 = vsub.f32 0.0, %v95
    %v224 = vsub.f32 0.0, %v96
    %v225 = vsub.f32 0.0, %v97
    %v226 = vsub.f32 0.0, %v98
    %v227 = vsub.f32 0.0, %v99
    %v228 = vsub.f32 0.0, %v100
    %v229 = vsub.f32 0.0, %v101
    %v230 = vsub.f32 0.0, %v102
    %v231 = vsub.f32 0.0, %v103
    %v232 = vsub.f32 0.0, %v104
    %v233 = vsub.f32 0.0, %v105
    %v234 = vsub.f32 0.0, %v106
    %v235 = vsub.f32 0.0, %v107
    %v236 = vsub.f32 0.0, %v108
    %v237 = vsub.f32 0.0, %v109
    %v238 = vsub.f32 0.0, %v110
    %v239 = vsub.f32 0.0, %v111
    %v240 = vsub.f32 0.0, %v112
    %v241 = vsub.f32 0.0, %v113
    %v242 = vsub.f32 0.0, %v114
    %v243 = vsub.f32 0.0, %v115
    %v244 = vsub.f32 0.0, %v116
    %v245 = vsub.f32 0.0, %v117
    %v246 = vsub.f32 0.0, %v118
    %v247 = vsub.f32 0.0, %v119
    %v248 = vsub.f32 0.0, %v120
    %v249 = vsub.f32 0.0, %v121
    %v250 = vsub.f32 0.0, %v122
    %v251 = vsub.f32 0.0, %v123
    %v252 = vsub.f32 0.0, %v124
    %v253 = vsub.f32 0.0, %v125
    %v254 = vsub.f32 0.0, %v126
    %v255 = vsub.f32 0.0, %v127
    %v256 = vsub.f32 0.0, %v128
    %v257 = vsub.f32 0.0, %v129
    %v258 = vsub.f32 0.0, %v130
    %v259 = vsub.f32 0.0, %v131
    %v260 = vsub.f32 0.0, %v132
    %v261 = vsub.f32 0.0, %v133
    %v262 = vsub.f32 0.0, %v134
    %v263 = vsub.f32 0.0, %v135
    %v264 = vsub.f32 0.0, %v136
    %v265 = vsub.f32 0.0, %v137
    %v266 = vsub.f32 0.0, %v138
    %v267 = vsub.f32 0.0, %v139
    %v268 = vsub.f32 0.0, %v140
    %v269 = vsub.f32 0.0, %v141
    %v270 = vsub.f32 0.0, %v142
    %v271 = vsub.f32 0.0, %v143
    %v272 = vsub.f32 0.0, %v144
    %v273 = vsub.f32 0.0, %v145
    %v274 = vsub.f32 0.0, %v146
    %v275 = vsub.f32 0.0, %v147
    %v276 = vsub.f32 0.0, %v148
    %v277 = vsub.f32 0.0, %v149
    %v278 = vsub.f32 0.0, %v150
    %279 = vst [vmem:[#allocation5] sm:$0xff] %v151
    %280 = vst [vmem:[#allocation5 + $0x8] sm:$0xff] %v152
    %281 = vst [vmem:[#allocation5 + $0x10] sm:$0xff] %v153
    %282 = vst [vmem:[#allocation5 + $0x18] sm:$0xff] %v154
    %283 = vst [vmem:[#allocation5 + $0x20] sm:$0xff] %v155
    %284 = vst [vmem:[#allocation5 + $0x28] sm:$0xff] %v156
    %285 = vst [vmem:[#allocation5 + $0x30] sm:$0xff] %v157
    %286 = vst [vmem:[#allocation5 + $0x38] sm:$0xff] %v158
    %287 = vst [vmem:[#allocation5 + $0x40] sm:$0xff] %v159
    %288 = vst [vmem:[#allocation5 + $0x48] sm:$0xff] %v160
    %289 = vst [vmem:[#allocation5 + $0x50] sm:$0xff] %v161
    %290 = vst [vmem:[#allocation5 + $0x58] sm:$0xff] %v162
    %291 = vst [vmem:[#allocation5 + $0x60] sm:$0xff] %v163
    %292 = vst [vmem:[#allocation5 + $0x68] sm:$0xff] %v164
    %293 = vst [vmem:[#allocation5 + $0x70] sm:$0xff] %v165
    %294 = vst [vmem:[#allocation5 + $0x78] sm:$0xff] %v166
    %295 = vst [vmem:[#allocation5 + $0x80] sm:$0xff] %v167
    %296 = vst [vmem:[#allocation5 + $0x88] sm:$0xff] %v168
    %297 = vst [vmem:[#allocation5 + $0x90] sm:$0xff] %v169
    %298 = vst [vmem:[#allocation5 + $0x98] sm:$0xff] %v170
    %299 = vst [vmem:[#allocation5 + $0xa0] sm:$0xff] %v171
    %300 = vst [vmem:[#allocation5 + $0xa8] sm:$0xff] %v172
    %301 = vst [vmem:[#allocation5 + $0xb0] sm:$0xff] %v173
    %302 = vst [vmem:[#allocation5 + $0xb8] sm:$0xff] %v174
    %303 = vst [vmem:[#allocation5 + $0xc0] sm:$0xff] %v175
    %304 = vst [vmem:[#allocation5 + $0xc8] sm:$0xff] %v176
    %305 = vst [vmem:[#allocation5 + $0xd0] sm:$0xff] %v177
    %306 = vst [vmem:[#allocation5 + $0xd8] sm:$0xff] %v178
    %307 = vst [vmem:[#allocation5 + $0xe0] sm:$0xff] %v179
    %308 = vst [vmem:[#allocation5 + $0xe8] sm:$0xff] %v180
    %309 = vst [vmem:[#allocation5 + $0xf0] sm:$0xff] %v181
    %310 = vst [vmem:[#allocation5 + $0xf8] sm:$0xff] %v182
    %311 = vst [vmem:[#allocation5 + $0x100] sm:$0xff] %v183
    %312 = vst [vmem:[#allocation5 + $0x108] sm:$0xff] %v184
    %313 = vst [vmem:[#allocation5 + $0x110] sm:$0xff] %v185
    %314 = vst [vmem:[#allocation5 + $0x118] sm:$0xff] %v186
    %315 = vst [vmem:[#allocation5 + $0x120] sm:$0xff] %v187
    %316 = vst [vmem:[#allocation5 + $0x128] sm:$0xff] %v188
    %317 = vst [vmem:[#allocation5 + $0x130] sm:$0xff] %v189
    %318 = vst [vmem:[#allocation5 + $0x138] sm:$0xff] %v190
    %319 = vst [vmem:[#allocation5 + $0x140] sm:$0xff] %v191
    %320 = vst [vmem:[#allocation5 + $0x148] sm:$0xff] %v192
    %321 = vst [vmem:[#allocation5 + $0x150] sm:$0xff] %v193
    %322 = vst [vmem:[#allocation5 + $0x158] sm:$0xff] %v194
    %323 = vst [vmem:[#allocation5 + $0x160] sm:$0xff] %v195
    %324 = vst [vmem:[#allocation5 + $0x168] sm:$0xff] %v196
    %325 = vst [vmem:[#allocation5 + $0x170] sm:$0xff] %v197
    %326 = vst [vmem:[#allocation5 + $0x178] sm:$0xff] %v198
    %327 = vst [vmem:[#allocation5 + $0x180] sm:$0xff] %v199
    %328 = vst [vmem:[#allocation5 + $0x188] sm:$0xff] %v200
    %329 = vst [vmem:[#allocation5 + $0x190] sm:$0xff] %v201
    %330 = vst [vmem:[#allocation5 + $0x198] sm:$0xff] %v202
    %331 = vst [vmem:[#allocation5 + $0x1a0] sm:$0xff] %v203
    %332 = vst [vmem:[#allocation5 + $0x1a8] sm:$0xff] %v204
    %333 = vst [vmem:[#allocation5 + $0x1b0] sm:$0xff] %v205
    %334 = vst [vmem:[#allocation5 + $0x1b8] sm:$0xff] %v206
    %335 = vst [vmem:[#allocation5 + $0x1c0] sm:$0xff] %v207
    %336 = vst [vmem:[#allocation5 + $0x1c8] sm:$0xff] %v208
    %337 = vst [vmem:[#allocation5 + $0x1d0] sm:$0xff] %v209
    %338 = vst [vmem:[#allocation5 + $0x1d8] sm:$0xff] %v210
    %339 = vst [vmem:[#allocation5 + $0x1e0] sm:$0xff] %v211
    %340 = vst [vmem:[#allocation5 + $0x1e8] sm:$0xff] %v212
    %341 = vst [vmem:[#allocation5 + $0x1f0] sm:$0xff] %v213
    %342 = vst [vmem:[#allocation5 + $0x1f8] sm:$0xff] %v214
    %343 = vst [vmem:[#allocation5 + $0x200] sm:$0xff] %v215
    %344 = vst [vmem:[#allocation5 + $0x208] sm:$0xff] %v216
    %345 = vst [vmem:[#allocation5 + $0x210] sm:$0xff] %v217
    %346 = vst [vmem:[#allocation5 + $0x218] sm:$0xff] %v218
    %347 = vst [vmem:[#allocation5 + $0x220] sm:$0xff] %v219
    %348 = vst [vmem:[#allocation5 + $0x228] sm:$0xff] %v220
    %349 = vst [vmem:[#allocation5 + $0x230] sm:$0xff] %v221
    %350 = vst [vmem:[#allocation5 + $0x238] sm:$0xff] %v222
    %351 = vst [vmem:[#allocation5 + $0x240] sm:$0xff] %v223
    %352 = vst [vmem:[#allocation5 + $0x248] sm:$0xff] %v224
    %353 = vst [vmem:[#allocation5 + $0x250] sm:$0xff] %v225
    %354 = vst [vmem:[#allocation5 + $0x258] sm:$0xff] %v226
    %355 = vst [vmem:[#allocation5 + $0x260] sm:$0xff] %v227
    %356 = vst [vmem:[#allocation5 + $0x268] sm:$0xff] %v228
    %357 = vst [vmem:[#allocation5 + $0x270] sm:$0xff] %v229
    %358 = vst [vmem:[#allocation5 + $0x278] sm:$0xff] %v230
    %359 = vst [vmem:[#allocation5 + $0x280] sm:$0xff] %v231
    %360 = vst [vmem:[#allocation5 + $0x288] sm:$0xff] %v232
    %361 = vst [vmem:[#allocation5 + $0x290] sm:$0xff] %v233
    %362 = vst [vmem:[#allocation5 + $0x298] sm:$0xff] %v234
    %363 = vst [vmem:[#allocation5 + $0x2a0] sm:$0xff] %v235
    %364 = vst [vmem:[#allocation5 + $0x2a8] sm:$0xff] %v236
    %365 = vst [vmem:[#allocation5 + $0x2b0] sm:$0xff] %v237
    %366 = vst [vmem:[#allocation5 + $0x2b8] sm:$0xff] %v238
    %367 = vst [vmem:[#allocation5 + $0x2c0] sm:$0xff] %v239
    %368 = vst [vmem:[#allocation5 + $0x2c8] sm:$0xff] %v240
    %369 = vst [vmem:[#allocation5 + $0x2d0] sm:$0xff] %v241
    %370 = vst [vmem:[#allocation5 + $0x2d8] sm:$0xff] %v242
    %371 = vst [vmem:[#allocation5 + $0x2e0] sm:$0xff] %v243
    %372 = vst [vmem:[#allocation5 + $0x2e8] sm:$0xff] %v244
    %373 = vst [vmem:[#allocation5 + $0x2f0] sm:$0xff] %v245
    %374 = vst [vmem:[#allocation5 + $0x2f8] sm:$0xff] %v246
    %375 = vst [vmem:[#allocation5 + $0x300] sm:$0xff] %v247
    %376 = vst [vmem:[#allocation5 + $0x308] sm:$0xff] %v248
    %377 = vst [vmem:[#allocation5 + $0x310] sm:$0xff] %v249
    %378 = vst [vmem:[#allocation5 + $0x318] sm:$0xff] %v250
    %379 = vst [vmem:[#allocation5 + $0x320] sm:$0xff] %v251
    %380 = vst [vmem:[#allocation5 + $0x328] sm:$0xff] %v252
    %381 = vst [vmem:[#allocation5 + $0x330] sm:$0xff] %v253
    %382 = vst [vmem:[#allocation5 + $0x338] sm:$0xff] %v254
    %383 = vst [vmem:[#allocation5 + $0x340] sm:$0xff] %v255
    %384 = vst [vmem:[#allocation5 + $0x348] sm:$0xff] %v256
    %385 = vst [vmem:[#allocation5 + $0x350] sm:$0xff] %v257
    %386 = vst [vmem:[#allocation5 + $0x358] sm:$0xff] %v258
    %387 = vst [vmem:[#allocation5 + $0x360] sm:$0xff] %v259
    %388 = vst [vmem:[#allocation5 + $0x368] sm:$0xff] %v260
    %389 = vst [vmem:[#allocation5 + $0x370] sm:$0xff] %v261
    %390 = vst [vmem:[#allocation5 + $0x378] sm:$0xff] %v262
    %391 = vst [vmem:[#allocation5 + $0x380] sm:$0xff] %v263
    %392 = vst [vmem:[#allocation5 + $0x388] sm:$0xff] %v264
    %393 = vst [vmem:[#allocation5 + $0x390] sm:$0xff] %v265
    %394 = vst [vmem:[#allocation5 + $0x398] sm:$0xff] %v266
    %395 = vst [vmem:[#allocation5 + $0x3a0] sm:$0xff] %v267
    %396 = vst [vmem:[#allocation5 + $0x3a8] sm:$0xff] %v268
    %397 = vst [vmem:[#allocation5 + $0x3b0] sm:$0xff] %v269
    %398 = vst [vmem:[#allocation5 + $0x3b8] sm:$0xff] %v270
    %399 = vst [vmem:[#allocation5 + $0x3c0] sm:$0xff] %v271
    %400 = vst [vmem:[#allocation5 + $0x3c8] sm:$0xff] %v272
    %401 = vst [vmem:[#allocation5 + $0x3d0] sm:$0xff] %v273
    %402 = vst [vmem:[#allocation5 + $0x3d8] sm:$0xff] %v274
    %403 = vst [vmem:[#allocation5 + $0x3e0] sm:$0xff] %v275
    %404 = vst [vmem:[#allocation5 + $0x3e8] sm:$0xff] %v276
    %405 = vst [vmem:[#allocation5 + $0x3f0] sm:$0xff] %v277
    %406 = vst [vmem:[#allocation5 + $0x3f8] sm:$0xff] %v278
    // Predicated region
    $region10: #{tpu_custom_call.1} parent=1 // pred_check
      _
    $region11: #{tpu_custom_call.1} parent=1 // pred_check_branch
      %408 = sbr.rel (0) target = $region13
    $region12: #{tpu_custom_call.1} parent=1 // pred_region
      %s410 = ssub.s32 16384, 16384
      %411 = vsyncadd [#allocation4], %s410
      %s412 = sshll.u32 [#allocation5], 4
      %s413 = int_to_ptr.vmem [resolvable:$true] %s412
      %418 = dma.vmem_to_hbm [thread:$0]  %s413, 16384, %s1, [#allocation4], 4096, 4096, 256
    $region13: #{tpu_custom_call.1} parent=1 // pred_fallthru
      _
    // Predicated region
    $region14: #{tpu_custom_call.1} parent=1 // pred_check
      _
    $region15: #{tpu_custom_call.1} parent=1 // pred_check_branch
      %420 = sbr.rel (0) target = $region17
    $region16: #{tpu_custom_call.1} parent=1 // pred_region
      %421 = dma.done [#allocation4], 16384
    $region17: #{tpu_custom_call.1} parent=1 // pred_fallthru
      _
    %422 = vsyncpa [#allocation3], 1
    %423 = vsyncpa [#allocation4], 1

</llo_original>
